<compile_context>
chip_gen: v7x
topology: tpu7x:2x2x1
jax: 0.10.0
libtpu: 0.0.40
codegen_flags: <defaults>
</compile_context>

<pallas_src>
import functools

import jax
import jax.numpy as jnp
from jax.experimental import pallas as pl
from jax.experimental.pallas import tpu as pltpu


def _dino_loss_kernel(s_ref, t_ref, o_ref, *, student_temp, n_teacher):
    """One (batch_tile, student_view) grid step.

    s_ref: (b_tile, D)     student logits, view i, batch tile b       (streamed)
    t_ref: (T, b_tile, D)  teacher probabilities, ALL views, batch tile b
                           (fetched once per batch tile, reused across views)
    o_ref: (T, 128)        per-(i, j) pair loss sums for this batch tile,
                           broadcast over the 128-lane axis
    """
    d = s_ref.shape[-1]

    # ---- student log-softmax (computed once, reused for every teacher view) --
    s = s_ref[...].astype(jnp.float32)
    s = jnp.where(jnp.isfinite(s), s, 0.0)                      # NaN/Inf -> 0
    s_scaled = jnp.clip(s * (1.0 / student_temp), -10.0, 10.0)
    # After the clip, exp() is bounded by e^10 so no max-shift is needed.
    s_sum = jnp.maximum(jnp.sum(jnp.exp(s_scaled), axis=-1, keepdims=True),
                        1e-10)
    lsm = s_scaled - jnp.log(s_sum)                              # (b_tile, D)

    # ---- cross entropy against every teacher view of this batch tile ---------
    inv_d = 1.0 / d
    for j in range(n_teacher):                                   # static, small
        t = t_ref[j].astype(jnp.float32)                         # (b_tile, D)
        t = jnp.where(jnp.isfinite(t), t, inv_d)                 # NaN/Inf -> 1/D
        row = jnp.sum(t * lsm, axis=-1, keepdims=True)           # (b_tile, 1)
        row = jnp.clip(row, -10.0, 0.0)
        pair = jnp.sum(row, axis=0, keepdims=True)               # (1, 1)
        o_ref[pl.ds(j, 1), :] = jnp.broadcast_to(pair, (1, 128))


def _vmem_caps():
    """Generation-aware (budget_for_pipeline_buffers, scoped_vmem_limit)."""
    try:
        cap = int(pltpu.get_tpu_info().vmem_capacity_bytes)
    except Exception:
        cap = 64 * 1024 * 1024       # conservative: v7x per-TensorCore VMEM
    budget = int(min(cap * 0.55, 72 * 1024 * 1024))   # ~35 MiB v7x, ~72 MiB v5e/v6e
    limit = int(min(cap * 0.75, 100 * 1024 * 1024))   # headroom over the budget
    return budget, limit


def _pick_b_tile(batch, d, t_views, in_itemsize, budget):
    """Largest batch tile whose pipeline buffers fit the generation budget.

    Per batch row: teacher (T views) + student, double buffered in the input
    dtype, plus ~3 f32 D-wide in-kernel temporaries (lsm, guarded teacher, ...).
    """
    per_row = d * (2 * in_itemsize * (t_views + 1) + 3 * 4)
    step = 16 if in_itemsize < 4 else 8          # sublane packing for bf16
    cap = max(step, (budget // max(per_row, 1)) // step * step)
    if batch <= cap:
        return batch
    best = None
    for bt in range(cap, 0, -1):                 # largest divisor of batch <= cap
        if batch % bt == 0:
            if bt % step == 0:
                return bt
            if best is None:
                best = bt
    return best if best is not None else batch


def dino_loss(student_stack, teacher_stack, student_temp=0.1, *, b_tile=None):
    """student_stack: (S, B, D); teacher_stack: (T, B, D). Returns scalar f32.
    Inputs may be f32 or bf16 (cast to f32 inside the kernel)."""
    S, B, D = student_stack.shape
    T, Bt, Dt = teacher_stack.shape
    assert (B, D) == (Bt, Dt)
    assert S > 0 and T > 0
    assert student_stack.dtype == teacher_stack.dtype

    itemsize = jnp.dtype(student_stack.dtype).itemsize
    budget, vmem_limit = _vmem_caps()
    if b_tile is None:
        b_tile = _pick_b_tile(B, D, T, itemsize, budget)
    assert B % b_tile == 0
    nb = B // b_tile

    kernel = functools.partial(
        _dino_loss_kernel,
        student_temp=float(student_temp),
        n_teacher=T,
    )

    cost = pl.CostEstimate(
        flops=int(2 * S * T * B * D + 8 * S * B * D),
        transcendentals=int(S * B * D + S * B),
        bytes_accessed=int((S + T) * B * D * itemsize + nb * S * T * 128 * 4),
    )

    partials = pl.pallas_call(
        kernel,
        out_shape=jax.ShapeDtypeStruct((nb, S, T, 128), jnp.float32),
        grid_spec=pltpu.PrefetchScalarGridSpec(
            num_scalar_prefetch=0,
            grid=(nb, S),
            in_specs=[
                # student view i, batch tile b (streamed every step)
                pl.BlockSpec((pl.Squeezed(), b_tile, D),
                             lambda b, i: (i, b, 0)),
                # ALL teacher views of batch tile b; index_map independent of i
                # -> DMA'd once per batch tile and reused across student views.
                pl.BlockSpec((T, b_tile, D),
                             lambda b, i: (0, b, 0)),
            ],
            out_specs=pl.BlockSpec((pl.Squeezed(), pl.Squeezed(), T, 128),
                                   lambda b, i: (b, i, 0, 0)),
        ),
        compiler_params=pltpu.CompilerParams(
            dimension_semantics=("parallel", "parallel"),
            vmem_limit_bytes=vmem_limit,
        ),
        cost_estimate=cost,
    )(student_stack, teacher_stack)

    # Finalize on the tiny (nb, S, T) array in plain JAX:
    # sum over batch tiles -> mean over batch -> guard -> negate -> / (S*T).
    pair_sums = jnp.sum(partials[:, :, :, 0], axis=0)           # (S, T)
    batch_means = pair_sums * (1.0 / B)
    batch_means = jnp.where(jnp.isfinite(batch_means), batch_means, 0.1)
    n_pairs = S * T            # reference counts every (student, teacher) pair
    return -jnp.sum(batch_means) / n_pairs


# ----- plain-JAX glue mirroring DINOLoss.softmax_center_teacher (no_grad path) -----
# TODO(synk): EMA center update (update_center/apply_center_update with
# dist.all_reduce) and sinkhorn_knopp_teacher are no_grad state maintenance,
# not part of forward(), and are not implemented here.
def softmax_center_teacher(teacher_output, center, teacher_temp,
                           out_dtype=jnp.float32):
    centered = jnp.clip(teacher_output - center, -50.0, 50.0)
    scaled = centered / teacher_temp
    m = jnp.max(scaled, axis=-1, keepdims=True)
    e = jnp.exp(scaled - m)
    s = jnp.maximum(jnp.sum(e, axis=-1, keepdims=True), 1e-10)
    return (e / s).astype(out_dtype)


if __name__ == "__main__":
    # Small shapes consistent with the module: out_dim=256, batch=16,
    # 3 student views and 2 teacher views (S != T exercises pair counting).
    S, T, B, D = 3, 2, 16, 256
    student_temp = 0.1
    teacher_temp = 0.07

    key = jax.random.PRNGKey(0)
    k_s, k_t = jax.random.split(key)

    student_stack = jax.random.normal(k_s, (S, B, D), dtype=jnp.float32)
    teacher_logits = jax.random.normal(k_t, (T, B, D), dtype=jnp.float32)

    # register_buffer('center', torch.zeros(1, out_dim)) — deterministic init.
    center = jnp.zeros((1, D), dtype=jnp.float32)
    teacher_stack = softmax_center_teacher(teacher_logits, center, teacher_temp)

    # Pure-JAX reference mirroring the PyTorch forward exactly.
    def ref_loss(ss, ts):
        ss = ss.astype(jnp.float32)
        ts = ts.astype(jnp.float32)
        total = 0.0
        for i in range(ss.shape[0]):
            s = jnp.where(jnp.isfinite(ss[i]), ss[i], 0.0)
            sc = jnp.clip(s / student_temp, -10.0, 10.0)
            e = jnp.exp(sc - sc.max(-1, keepdims=True))
            lsm = jnp.log(e / jnp.maximum(e.sum(-1, keepdims=True), 1e-10))
            for j in range(ts.shape[0]):
                t = jnp.where(jnp.isfinite(ts[j]), ts[j], 1.0 / ts.shape[-1])
                bl = jnp.clip(jnp.sum(t * lsm, -1), -10.0, 0.0).mean()
                bl = jnp.where(jnp.isfinite(bl), bl, 0.1)
                total = total - bl
        return total / (ss.shape[0] * ts.shape[0])

    ref = ref_loss(student_stack, teacher_stack)

    # 1) f32, auto tile (single batch tile).
    loss = dino_loss(student_stack, teacher_stack, student_temp=student_temp)
    jax.block_until_ready(loss)
    assert loss.shape == ()
    assert bool(jnp.isfinite(loss))
    assert bool(jnp.abs(loss - ref) < 1e-3), (float(loss), float(ref))

    # 2) f32, forced multi-tile (exercises the batch-tile reduction in wrapper).
    loss_mt = dino_loss(student_stack, teacher_stack,
                        student_temp=student_temp, b_tile=8)
    jax.block_until_ready(loss_mt)
    assert bool(jnp.abs(loss_mt - ref) < 1e-3), (float(loss_mt), float(ref))

    # 3) bf16 inputs (halves the dominant HBM stream; kernel math stays f32).
    student_bf16 = student_stack.astype(jnp.bfloat16)
    teacher_bf16 = softmax_center_teacher(teacher_logits, center, teacher_temp,
                                          out_dtype=jnp.bfloat16)
    loss_bf16 = dino_loss(student_bf16, teacher_bf16, student_temp=student_temp)
    jax.block_until_ready(loss_bf16)
    ref_bf16 = ref_loss(student_bf16, teacher_bf16)
    assert bool(jnp.isfinite(loss_bf16))
    assert bool(jnp.abs(loss_bf16 - ref_bf16) < 1e-3), (
        float(loss_bf16), float(ref_bf16))

    print("KERNEL_OK")
</pallas_src>

<mosaic_0001>
module attributes {stable_mosaic.version = 11 : i64} {
  func.func @_dino_loss_kernel(%arg0: i32, %arg1: i32, %arg2: memref<1x16x256xf32, #tpu.memory_space<vmem>>, %arg3: memref<2x16x256xf32, #tpu.memory_space<vmem>>, %arg4: memref<1x1x2x128xf32, #tpu.memory_space<vmem>>) attributes {dimension_semantics = [#tpu.dimension_semantics<parallel>, #tpu.dimension_semantics<parallel>], iteration_bounds = array<i64: 1, 3>, scalar_prefetch = 0 : i64, scratch_operands = 0 : i64, tpu.core_type = #tpu.core_type<tc>, window_params = [{transform_indices = @transform_0, window_bounds = array<i64: 1, 16, 256>}, {transform_indices = @transform_1, window_bounds = array<i64: 2, 16, 256>}, {transform_indices = @transform_2, window_bounds = array<i64: 1, 1, 2, 128>}]} {
    %c0 = arith.constant 0 : index
    %c0_0 = arith.constant 0 : index
    %c0_1 = arith.constant 0 : index
    %0 = vector.load %arg2[%c0, %c0_0, %c0_1] : memref<1x16x256xf32, #tpu.memory_space<vmem>>, vector<1x16x256xf32>
    %1 = vector.shape_cast %0 : vector<1x16x256xf32> to vector<16x256xf32>
    %2 = tpu.weird %1 : vector<16x256xf32> -> vector<16x256xi1>
    %cst = arith.constant dense<true> : vector<16x256xi1>
    %3 = arith.xori %2, %cst : vector<16x256xi1>
    %cst_2 = arith.constant 0.000000e+00 : f32
    %4 = vector.broadcast %cst_2 : f32 to vector<16x256xf32>
    %5 = arith.select %3, %1, %4 : vector<16x256xi1>, vector<16x256xf32>
    %cst_3 = arith.constant 1.000000e+01 : f32
    %6 = vector.broadcast %cst_3 : f32 to vector<16x256xf32>
    %7 = arith.mulf %5, %6 : vector<16x256xf32>
    %cst_4 = arith.constant -1.000000e+01 : f32
    %cst_5 = arith.constant 1.000000e+01 : f32
    %8 = vector.broadcast %cst_4 : f32 to vector<16x256xf32>
    %9 = arith.maximumf %8, %7 : vector<16x256xf32>
    %10 = vector.broadcast %cst_5 : f32 to vector<16x256xf32>
    %11 = arith.minimumf %10, %9 : vector<16x256xf32>
    %12 = math.exp %11 : vector<16x256xf32>
    %cst_6 = arith.constant dense<0.000000e+00> : vector<16xf32>
    %13 = vector.multi_reduction <add>, %12, %cst_6 [1] : vector<16x256xf32> to vector<16xf32>
    %14 = vector.shape_cast %13 : vector<16xf32> to vector<16x1xf32>
    %cst_7 = arith.constant 1.000000e-10 : f32
    %15 = vector.broadcast %cst_7 : f32 to vector<16x1xf32>
    %16 = arith.maximumf %14, %15 : vector<16x1xf32>
    %17 = math.log %16 : vector<16x1xf32>
    %18 = vector.broadcast %17 : vector<16x1xf32> to vector<16x256xf32>
    %19 = arith.subf %11, %18 : vector<16x256xf32>
    %c0_8 = arith.constant 0 : index
    %c0_9 = arith.constant 0 : index
    %c0_10 = arith.constant 0 : index
    %20 = vector.load %arg3[%c0_8, %c0_9, %c0_10] : memref<2x16x256xf32, #tpu.memory_space<vmem>>, vector<1x16x256xf32>
    %21 = vector.shape_cast %20 : vector<1x16x256xf32> to vector<16x256xf32>
    %22 = tpu.weird %21 : vector<16x256xf32> -> vector<16x256xi1>
    %cst_11 = arith.constant dense<true> : vector<16x256xi1>
    %23 = arith.xori %22, %cst_11 : vector<16x256xi1>
    %cst_12 = arith.constant 3.906250e-03 : f32
    %24 = vector.broadcast %cst_12 : f32 to vector<16x256xf32>
    %25 = arith.select %23, %21, %24 : vector<16x256xi1>, vector<16x256xf32>
    %26 = arith.mulf %25, %19 : vector<16x256xf32>
    %cst_13 = arith.constant dense<0.000000e+00> : vector<16xf32>
    %27 = vector.multi_reduction <add>, %26, %cst_13 [1] : vector<16x256xf32> to vector<16xf32>
    %28 = vector.shape_cast %27 : vector<16xf32> to vector<16x1xf32>
    %cst_14 = arith.constant -1.000000e+01 : f32
    %cst_15 = arith.constant 0.000000e+00 : f32
    %29 = vector.broadcast %cst_14 : f32 to vector<16x1xf32>
    %30 = arith.maximumf %29, %28 : vector<16x1xf32>
    %31 = vector.broadcast %cst_15 : f32 to vector<16x1xf32>
    %32 = arith.minimumf %31, %30 : vector<16x1xf32>
    %cst_16 = arith.constant dense<0.000000e+00> : vector<1xf32>
    %33 = vector.multi_reduction <add>, %32, %cst_16 [0] : vector<16x1xf32> to vector<1xf32>
    %34 = vector.shape_cast %33 : vector<1xf32> to vector<1x1xf32>
    %35 = vector.shape_cast %34 : vector<1x1xf32> to vector<1x1xf32>
    %36 = vector.broadcast %35 : vector<1x1xf32> to vector<1x128xf32>
    %c0_17 = arith.constant 0 : index
    %c0_18 = arith.constant 0 : index
    %c0_19 = arith.constant 0 : index
    %c0_20 = arith.constant 0 : index
    %37 = vector.load %arg4[%c0_17, %c0_18, %c0_19, %c0_20] : memref<1x1x2x128xf32, #tpu.memory_space<vmem>>, vector<1x1x1x128xf32>
    %38 = vector.shape_cast %37 : vector<1x1x1x128xf32> to vector<1x128xf32>
    %39 = vector.shape_cast %36 : vector<1x128xf32> to vector<1x1x1x128xf32>
    tpu.vector_store %arg4[%c0_17, %c0_18, %c0_19, %c0_20], %39 {strides = array<i32>} : memref<1x1x2x128xf32, #tpu.memory_space<vmem>>, vector<1x1x1x128xf32>,
    %c1 = arith.constant 1 : index
    %c0_21 = arith.constant 0 : index
    %c0_22 = arith.constant 0 : index
    %40 = vector.load %arg3[%c1, %c0_21, %c0_22] : memref<2x16x256xf32, #tpu.memory_space<vmem>>, vector<1x16x256xf32>
    %41 = vector.shape_cast %40 : vector<1x16x256xf32> to vector<16x256xf32>
    %42 = tpu.weird %41 : vector<16x256xf32> -> vector<16x256xi1>
    %cst_23 = arith.constant dense<true> : vector<16x256xi1>
    %43 = arith.xori %42, %cst_23 : vector<16x256xi1>
    %cst_24 = arith.constant 3.906250e-03 : f32
    %44 = vector.broadcast %cst_24 : f32 to vector<16x256xf32>
    %45 = arith.select %43, %41, %44 : vector<16x256xi1>, vector<16x256xf32>
    %46 = arith.mulf %45, %19 : vector<16x256xf32>
    %cst_25 = arith.constant dense<0.000000e+00> : vector<16xf32>
    %47 = vector.multi_reduction <add>, %46, %cst_25 [1] : vector<16x256xf32> to vector<16xf32>
    %48 = vector.shape_cast %47 : vector<16xf32> to vector<16x1xf32>
    %cst_26 = arith.constant -1.000000e+01 : f32
    %cst_27 = arith.constant 0.000000e+00 : f32
    %49 = vector.broadcast %cst_26 : f32 to vector<16x1xf32>
    %50 = arith.maximumf %49, %48 : vector<16x1xf32>
    %51 = vector.broadcast %cst_27 : f32 to vector<16x1xf32>
    %52 = arith.minimumf %51, %50 : vector<16x1xf32>
    %cst_28 = arith.constant dense<0.000000e+00> : vector<1xf32>
    %53 = vector.multi_reduction <add>, %52, %cst_28 [0] : vector<16x1xf32> to vector<1xf32>
    %54 = vector.shape_cast %53 : vector<1xf32> to vector<1x1xf32>
    %55 = vector.shape_cast %54 : vector<1x1xf32> to vector<1x1xf32>
    %56 = vector.broadcast %55 : vector<1x1xf32> to vector<1x128xf32>
    %c0_29 = arith.constant 0 : index
    %c0_30 = arith.constant 0 : index
    %c1_31 = arith.constant 1 : index
    %c0_32 = arith.constant 0 : index
    %57 = vector.load %arg4[%c0_29, %c0_30, %c1_31, %c0_32] : memref<1x1x2x128xf32, #tpu.memory_space<vmem>>, vector<1x1x1x128xf32>
    %58 = vector.shape_cast %57 : vector<1x1x1x128xf32> to vector<1x128xf32>
    %59 = vector.shape_cast %56 : vector<1x128xf32> to vector<1x1x1x128xf32>
    tpu.vector_store %arg4[%c0_29, %c0_30, %c1_31, %c0_32], %59 {strides = array<i32>} : memref<1x1x2x128xf32, #tpu.memory_space<vmem>>, vector<1x1x1x128xf32>,
    return
  }
  func.func @transform_0(%arg0: i32, %arg1: i32) -> (i32, i32, i32) {
    %c0_i32 = arith.constant 0 : i32
    %c0_i32_0 = arith.constant 0 : i32
    return %arg1, %arg0, %c0_i32 : i32, i32, i32
  }
  func.func @transform_1(%arg0: i32, %arg1: i32) -> (i32, i32, i32) {
    %c0_i32 = arith.constant 0 : i32
    %c0_i32_0 = arith.constant 0 : i32
    %c0_i32_1 = arith.constant 0 : i32
    return %c0_i32, %arg0, %c0_i32_0 : i32, i32, i32
  }
  func.func @transform_2(%arg0: i32, %arg1: i32) -> (i32, i32, i32, i32) {
    %c0_i32 = arith.constant 0 : i32
    %c0_i32_0 = arith.constant 0 : i32
    %c0_i32_1 = arith.constant 0 : i32
    return %arg0, %arg1, %c0_i32, %c0_i32_0 : i32, i32, i32, i32
  }
}

</mosaic_0001>

<llo_original>
// kernel: tpu_custom_call.1
$region0: #{tpu_custom_call.1}
  #allocation0 [shape = 'u32[]', space=smem, size = 0x4, offset = 0x4, fixed_abs, tag = 'smem constant byte address 0x4 - core index']
  #allocation1 [shape = 'u32[144,128]{1,0:T(1,128)}', space=vmem, size = 0x12000, scoped, tag = 'internal scratch']
  %s0 = inlined_call_operand.hbm [shape: f32[3,16,256], index: 0, kind: input, shape index: {}]
  %s1 = inlined_call_operand.hbm [shape: f32[2,16,256], index: 1, kind: input, shape index: {}]
  %s2 = inlined_call_operand.hbm [shape: f32[1,3,2,128], index: 2, kind: output, shape index: {}]
  %s3 = sld [smem:[#allocation0]]
  $region49: #{tpu_custom_call.1} parent=0
    _
  %s5 = ssub.s32 1, %s3
  %s6 = scalar_select 0, %s5, %s3
  $region1: #{tpu_custom_call.1} parent=0
    #allocation2 [shape = 'u8[32768]{0}', space=vmem, size = 0x8000, scoped, tag = 'input window, operand 0']
    #allocation3 [shape = 's32[2]{0}', space=sflag, size = 0x8, scoped, tag = 'scoped memory for tpu_custom_call.1']
    #allocation4 [shape = 's32[2]{0}', space=sflag, size = 0x8, scoped, tag = 'scoped memory for tpu_custom_call.1']
    #allocation5 [shape = 'u8[32768]{0}', space=vmem, size = 0x8000, scoped, tag = 'input window, operand 1, single buffered']
    #allocation6 [shape = 's32[1]{0}', space=sflag, size = 0x4, scoped, tag = 'scoped memory for tpu_custom_call.1']
    #allocation7 [shape = 'u8[2048]{0}', space=vmem, size = 0x800, scoped, tag = 'output window, operand 0']
    %7 = vsyncpa [#allocation3], 0
    %s8 = scalar_lea.sflag [#allocation3], 1
    %9 = vsyncpa %s8, 0
    %10 = vsyncpa [#allocation6], 0
    %11 = vsyncpa [#allocation4], 0
    %s12 = scalar_lea.sflag [#allocation4], 1
    %13 = vsyncpa %s12, 0
    loop: start=0, step=1, limit=5
    $region2: #{tpu_custom_call.1} parent=1 // loop_pre_header
      _
    $region3: #{tpu_custom_call.1} parent=1 // loop_header
      %s15 = sphi 0, %s19
      %p16 = scmp.ge.s32.totalorder %s15, 5
      %s22 = sphi 0, %s34
      %s23 = sphi 0, %s30
      %s24 = sphi 0, %s22
      %s25 = sphi 0, %s23
      %s26 = sphi 0, %s24
      %s27 = sphi 0, %s25
      %s39 = sphi 0, %s41
      %s42 = sphi 0, %s39
      %s43 = sphi 0, %s42
      %s59 = sphi 0, %s43
      %s65 = sphi 0, %s67
      %s68 = sphi 0, %s65
      %s69 = sphi 0, %s68
      %s85 = sphi 0, %s69
      %s93 = sphi 0, %s95
      %s96 = sphi 0, %s93
      %s97 = sphi 0, %s96
      %s113 = sphi 0, %s97
    $region4: #{tpu_custom_call.1} parent=1 // loop_header_branch
      %18 = sbr.rel (%p16) target = $region8
    $region5: #{tpu_custom_call.1} parent=1 // loop_body
      %s20 = ssub.s32 %s15, 1
      %s21 = ssub.s32 %s15, 2
      %s28 = sadd.s32 1, %s23
      %p29 = scmp.ge.s32.totalorder %s28, 3
      %s30 = scalar_select %p29, 0, %s28
      %s31 = sadd.s32 1, %s22
      %s32 = scalar_select %p29, %s31, %s22
      %p33 = scmp.ge.s32.totalorder %s32, 1
      %s34 = scalar_select %p33, 0, %s32
      %s35 = ssub.s32 %s23, %s30
      %s36 = ssub.s32 %s22, %s34
      %s37 = sor.u32 %s35, %s36
      %p38 = scmp.eq.s32.totalorder %s37, 0
      %s40 = sadd.s32 %s39, 1
      %s41 = scalar_select %p38, %s39, %s40
      %p44 = pneg %p38
      %p45 = scmp.eq.s32.totalorder %s15, 2
      %p46 = por %p44, %p45
      %p47 = scmp.ne.s32.totalorder %s39, %s42
      %p48 = scmp.eq.s32.totalorder %s15, 0
      %p49 = por %p47, %p48
      %p50 = scmp.ne.s32.totalorder %s39, %s42
      %p51 = scmp.eq.s32.totalorder %s20, 2
      %p52 = por %p50, %p51
      %p53 = scmp.ne.s32.totalorder %s42, %s43
      %p54 = scmp.eq.s32.totalorder %s20, 0
      %p55 = por %p53, %p54
      %p56 = scmp.ne.s32.totalorder %s42, %s43
      %p57 = scmp.eq.s32.totalorder %s21, 2
      %p58 = por %p56, %p57
      %p60 = scmp.ne.s32.totalorder %s43, %s59
      %p61 = scmp.eq.s32.totalorder %s21, 0
      %p62 = por %p60, %p61
      %s63 = ssub.s32 %s22, %s34
      %p64 = scmp.eq.s32.totalorder %s63, 0
      %s66 = sadd.s32 %s65, 1
      %s67 = scalar_select %p64, %s65, %s66
      %p70 = pneg %p64
      %p71 = scmp.eq.s32.totalorder %s15, 2
      %p72 = por %p70, %p71
      %p73 = scmp.ne.s32.totalorder %s65, %s68
      %p74 = scmp.eq.s32.totalorder %s15, 0
      %p75 = por %p73, %p74
      %p76 = scmp.ne.s32.totalorder %s65, %s68
      %p77 = scmp.eq.s32.totalorder %s20, 2
      %p78 = por %p76, %p77
      %p79 = scmp.ne.s32.totalorder %s68, %s69
      %p80 = scmp.eq.s32.totalorder %s20, 0
      %p81 = por %p79, %p80
      %p82 = scmp.ne.s32.totalorder %s68, %s69
      %p83 = scmp.eq.s32.totalorder %s21, 2
      %p84 = por %p82, %p83
      %p86 = scmp.ne.s32.totalorder %s69, %s85
      %p87 = scmp.eq.s32.totalorder %s21, 0
      %p88 = por %p86, %p87
      %s89 = ssub.s32 %s22, %s34
      %s90 = ssub.s32 %s23, %s30
      %s91 = sor.u32 %s89, %s90
      %p92 = scmp.eq.s32.totalorder %s91, 0
      %s94 = sadd.s32 %s93, 1
      %s95 = scalar_select %p92, %s93, %s94
      %p98 = pneg %p92
      %p99 = scmp.eq.s32.totalorder %s15, 2
      %p100 = por %p98, %p99
      %p101 = scmp.ne.s32.totalorder %s93, %s96
      %p102 = scmp.eq.s32.totalorder %s15, 0
      %p103 = por %p101, %p102
      %p104 = scmp.ne.s32.totalorder %s93, %s96
      %p105 = scmp.eq.s32.totalorder %s20, 2
      %p106 = por %p104, %p105
      %p107 = scmp.ne.s32.totalorder %s96, %s97
      %p108 = scmp.eq.s32.totalorder %s20, 0
      %p109 = por %p107, %p108
      %p110 = scmp.ne.s32.totalorder %s96, %s97
      %p111 = scmp.eq.s32.totalorder %s21, 2
      %p112 = por %p110, %p111
      %p114 = scmp.ne.s32.totalorder %s97, %s113
      %p115 = scmp.eq.s32.totalorder %s21, 0
      %p116 = por %p114, %p115
      %p117 = scmp.le.s32.totalorder 1, %s15
      %p118 = scmp.lt.s32.totalorder %s15, 4
      %p119 = pnand %p117, %p118
      %p120 = pneg %p119
      // Predicated region
      $region9: #{tpu_custom_call.1} parent=5 // pred_check
        _
      $region10: #{tpu_custom_call.1} parent=5 // pred_check_branch
        %122 = sbr.rel (%p119) target = $region12
      $region11: #{tpu_custom_call.1} parent=5 // pred_region
        %s123 = ssub.s32 %s15, 1
        // Predicated region
        $region13: #{tpu_custom_call.1} parent=11 // pred_check
          %p124 = pneg %p81
        $region14: #{tpu_custom_call.1} parent=11 // pred_check_branch
          %126 = sbr.rel (%p124) target = $region16
        $region15: #{tpu_custom_call.1} parent=11 // pred_region
          %s127 = smul.u32 2, %s24
          %s129 = ssub.s32 1024, 1024
          %130 = vsyncadd [#allocation6], %s129
          %s131 = smul.addr %s127, 2
          %s132 = smul.addr %s131, 128
          %s133 = scalar_lea.hbm %s1, %s132
          %s134 = sshll.u32 [#allocation5], 4
          %s135 = int_to_ptr.vmem [resolvable:$true] %s134
          %140 = dma.hbm_to_vmem [thread:$0]  %s133, 1024, %s135, [#allocation6], 256, 256, 16
        $region16: #{tpu_custom_call.1} parent=11 // pred_fallthru
          _
      $region12: #{tpu_custom_call.1} parent=5 // pred_fallthru
        _
      %p141 = scmp.lt.s32.totalorder %s15, 3
      // Predicated region
      $region17: #{tpu_custom_call.1} parent=5 // pred_check
        %p142 = pneg %p141
      $region18: #{tpu_custom_call.1} parent=5 // pred_check_branch
        %144 = sbr.rel (%p142) target = $region20
      $region19: #{tpu_custom_call.1} parent=5 // pred_region
        // Predicated region
        $region21: #{tpu_custom_call.1} parent=19 // pred_check
          %p145 = pneg %p49
        $region22: #{tpu_custom_call.1} parent=19 // pred_check_branch
          %147 = sbr.rel (%p145) target = $region24
        $region23: #{tpu_custom_call.1} parent=19 // pred_region
          %s148 = sand.u32 %s39, 1
          %s149 = scalar_lea.sflag [#allocation3], %s148
          %s150 = sand.u32 %s39, 1
          %s151 = smul.addr %s150, 32
          %s152 = scalar_lea.vmem [#allocation2], %s151
          %s153 = smul.u32 2, %s22
          %s155 = ssub.s32 512, 512
          %156 = vsyncadd %s149, %s155
          %s157 = smul.addr %s153, 2
          %s158 = smul.addr %s23, 4
          %s159 = sadd.s32 %s157, %s158
          %s160 = smul.addr %s159, 128
          %s161 = scalar_lea.hbm %s0, %s160
          %s162 = sshll.u32 %s152, 4
          %s163 = int_to_ptr.vmem [resolvable:$true] %s162
          %168 = dma.hbm_to_vmem [thread:$0]  %s161, 512, %s163, %s149, 256, 256, 16
        $region24: #{tpu_custom_call.1} parent=19 // pred_fallthru
          _
      $region20: #{tpu_custom_call.1} parent=5 // pred_fallthru
        _
      %p169 = scmp.le.s32.totalorder 1, %s15
      %p170 = scmp.lt.s32.totalorder %s15, 4
      %p171 = pnand %p169, %p170
      %p172 = pneg %p171
      // Predicated region
      $region25: #{tpu_custom_call.1} parent=5 // pred_check
        _
      $region26: #{tpu_custom_call.1} parent=5 // pred_check_branch
        %174 = sbr.rel (%p171) target = $region28
      $region27: #{tpu_custom_call.1} parent=5 // pred_region
        %s175 = ssub.s32 %s15, 1
        %s176 = sand.u32 %s42, 1
        %s177 = scalar_lea.sflag [#allocation3], %s176
        %s178 = sand.u32 %s42, 1
        %s179 = smul.addr %s178, 32
        %s180 = scalar_lea.vmem [#allocation2], %s179
        // Predicated region
        $region29: #{tpu_custom_call.1} parent=27 // pred_check
          %p181 = pneg %p55
        $region30: #{tpu_custom_call.1} parent=27 // pred_check_branch
          %183 = sbr.rel (%p181) target = $region32
        $region31: #{tpu_custom_call.1} parent=27 // pred_region
          %184 = dma.done %s177, 512
        $region32: #{tpu_custom_call.1} parent=27 // pred_fallthru
          _
        // Predicated region
        $region33: #{tpu_custom_call.1} parent=27 // pred_check
          %p185 = pneg %p81
        $region34: #{tpu_custom_call.1} parent=27 // pred_check_branch
          %187 = sbr.rel (%p185) target = $region36
        $region35: #{tpu_custom_call.1} parent=27 // pred_region
          %188 = dma.done [#allocation6], 1024
        $region36: #{tpu_custom_call.1} parent=27 // pred_fallthru
          _
        %s189 = sand.u32 %s42, 1
        %s190 = scalar_lea.sflag [#allocation3], %s189
        %s191 = sand.u32 %s42, 1
        %s192 = smul.addr %s191, 32
        %s193 = scalar_lea.vmem [#allocation2], %s192
        %p194 = pneg %p55
        %p195 = pneg %p52
        %p196 = pneg %p81
        %p197 = pneg %p78
        %p198 = pneg %p109
        %p199 = pneg %p106
        %s200 = sand.u32 %s96, 1
        %s201 = scalar_lea.sflag [#allocation4], %s200
        %s202 = sand.u32 %s96, 1
        %s203 = smul.addr %s202, 2
        %s204 = scalar_lea.vmem [#allocation7], %s203
        %s205 = smul.u32 2, %s24
        %s206 = smul.u32 2, %s24
        %v207 = vld [vmem:[%s180] sm:$0xff]
        %v208 = vld [vmem:[%s180 + $0x8] sm:$0xff]
        %v209 = vld [vmem:[%s180 + $0x10] sm:$0xff]
        %v210 = vld [vmem:[%s180 + $0x18] sm:$0xff]
        %vm211 = vweird.f32 %v207
        %vm212 = vweird.f32 %v208
        %vm213 = vweird.f32 %v209
        %vm214 = vweird.f32 %v210
        %vm215 = vmxor %vm211, 1
        %vm216 = vmxor %vm212, 1
        %vm217 = vmxor %vm213, 1
        %vm218 = vmxor %vm214, 1
        %v219 = vsel %vm215, %v207, 0.0
        %v220 = vsel %vm216, %v208, 0.0
        %v221 = vsel %vm217, %v209, 0.0
        %v222 = vsel %vm218, %v210, 0.0
        %v223 = vmul.f32 %v219, 10.0
        %v224 = vmul.f32 %v220, 10.0
        %v225 = vmul.f32 %v221, 10.0
        %v226 = vmul.f32 %v222, 10.0
        %v227 = vmax.f32 %v223, -10.0
        %v228 = vmax.f32 %v224, -10.0
        %v229 = vmax.f32 %v225, -10.0
        %v230 = vmax.f32 %v226, -10.0
        %v231 = vmin.f32 %v227, 10.0
        %v232 = vmin.f32 %v228, 10.0
        %v233 = vmin.f32 %v229, 10.0
        %v234 = vmin.f32 %v230, 10.0
        %v235 = vmul.f32 %v231, 1.442695
        %v236 = vpow.pop %v235
        %v237 = vmul.f32 %v232, 1.442695
        %v238 = vpow.pop %v237
        %v239 = vmul.f32 %v233, 1.442695
        %v240 = vpow.pop %v239
        %v241 = vmul.f32 %v234, 1.442695
        %v242 = vpow.pop %v241
        %v243 = vadd.f32 %v236, %v238
        %244 = vadd.xlane.f32.xlu0 %v243
        %v245 = vpop.xlane.xlu0 %244
        %v246 = vadd.f32 %v240, %v242
        %247 = vadd.xlane.f32.xlu0 %v246
        %v248 = vpop.xlane.xlu0 %247
        %v249 = vmax.f32 %v245, 1e-10
        %v250 = vmax.f32 %v248, 1e-10
        %v251 = vlog2.pop %v249
        %v252 = vmul.f32 %v251, 0.6931472
        %v253 = vlog2.pop %v250
        %v254 = vmul.f32 %v253, 0.6931472
        %v255 = vsub.f32 %v231, %v252
        %v256 = vsub.f32 %v232, %v252
        %v257 = vsub.f32 %v233, %v254
        %v258 = vsub.f32 %v234, %v254
        %v259 = vld [vmem:[#allocation5] sm:$0xff]
        %v260 = vld [vmem:[#allocation5 + $0x8] sm:$0xff]
        %v261 = vld [vmem:[#allocation5 + $0x10] sm:$0xff]
        %v262 = vld [vmem:[#allocation5 + $0x18] sm:$0xff]
        %vm263 = vweird.f32 %v259
        %vm264 = vweird.f32 %v260
        %vm265 = vweird.f32 %v261
        %vm266 = vweird.f32 %v262
        %vm267 = vmxor %vm263, 1
        %vm268 = vmxor %vm264, 1
        %vm269 = vmxor %vm265, 1
        %vm270 = vmxor %vm266, 1
        %v271 = vsel %vm267, %v259, 0.00390625
        %v272 = vsel %vm268, %v260, 0.00390625
        %v273 = vsel %vm269, %v261, 0.00390625
        %v274 = vsel %vm270, %v262, 0.00390625
        %v275 = vmul.f32 %v271, %v255
        %v276 = vmul.f32 %v272, %v256
        %v277 = vmul.f32 %v273, %v257
        %v278 = vmul.f32 %v274, %v258
        %v279 = vadd.f32 %v275, %v276
        %280 = vadd.xlane.f32.xlu0 %v279
        %v281 = vpop.xlane.xlu0 %280
        %v282 = vadd.f32 %v277, %v278
        %283 = vadd.xlane.f32.xlu0 %v282
        %v284 = vpop.xlane.xlu0 %283
        %v285 = vmax.f32 %v281, -10.0
        %v286 = vmax.f32 %v284, -10.0
        %v287 = vmin.f32 %v285, 0.0
        %v288 = vmin.f32 %v286, 0.0
        %v289 = vadd.f32 %v287, %v288
        %v290 = vrot.slane %v289, 4
        %v291 = vadd.f32 %v289, %v290
        %v292 = vrot.slane %v291, 2
        %v293 = vadd.f32 %v291, %v292
        %v294 = vrot.slane %v293, 1
        %v295 = vadd.f32 %v293, %v294
        %296 = vst [vmem:[%s204] sm:$0x1] %v295
        %s297 = scalar_lea.vmem [#allocation5], 32
        %v298 = vld [vmem:[%s297] sm:$0xff]
        %v299 = vld [vmem:[%s297 + $0x8] sm:$0xff]
        %v300 = vld [vmem:[%s297 + $0x10] sm:$0xff]
        %v301 = vld [vmem:[%s297 + $0x18] sm:$0xff]
        %vm302 = vweird.f32 %v298
        %vm303 = vweird.f32 %v299
        %vm304 = vweird.f32 %v300
        %vm305 = vweird.f32 %v301
        %vm306 = vmxor %vm302, 1
        %vm307 = vmxor %vm303, 1
        %vm308 = vmxor %vm304, 1
        %vm309 = vmxor %vm305, 1
        %v310 = vsel %vm306, %v298, 0.00390625
        %v311 = vsel %vm307, %v299, 0.00390625
        %v312 = vsel %vm308, %v300, 0.00390625
        %v313 = vsel %vm309, %v301, 0.00390625
        %v314 = vmul.f32 %v310, %v255
        %v315 = vmul.f32 %v311, %v256
        %v316 = vmul.f32 %v312, %v257
        %v317 = vmul.f32 %v313, %v258
        %v318 = vadd.f32 %v314, %v315
        %319 = vadd.xlane.f32.xlu0 %v318
        %v320 = vpop.xlane.xlu0 %319
        %v321 = vadd.f32 %v316, %v317
        %322 = vadd.xlane.f32.xlu0 %v321
        %v323 = vpop.xlane.xlu0 %322
        %v324 = vmax.f32 %v320, -10.0
        %v325 = vmax.f32 %v323, -10.0
        %v326 = vmin.f32 %v324, 0.0
        %v327 = vmin.f32 %v325, 0.0
        %v328 = vadd.f32 %v326, %v327
        %v329 = vrot.slane %v328, 4
        %v330 = vadd.f32 %v328, %v329
        %v331 = vrot.slane %v330, 2
        %v332 = vadd.f32 %v330, %v331
        %v333 = vrot.slane %v332, 1
        %v334 = vadd.f32 %v332, %v333
        %335 = vst [vmem:[%s204 + $0x1] sm:$0x1] %v334
        %s336 = sand.u32 %s96, 1
        %s337 = scalar_lea.sflag [#allocation4], %s336
        %s338 = sand.u32 %s96, 1
        %s339 = smul.addr %s338, 2
        %s340 = scalar_lea.vmem [#allocation7], %s339
        // Predicated region
        $region37: #{tpu_custom_call.1} parent=27 // pred_check
          %p341 = pneg %p106
        $region38: #{tpu_custom_call.1} parent=27 // pred_check_branch
          %343 = sbr.rel (%p341) target = $region40
        $region39: #{tpu_custom_call.1} parent=27 // pred_region
          %s345 = ssub.s32 32, 32
          %346 = vsyncadd %s337, %s345
          %s347 = smul.addr %s24, 3
          %s348 = sadd.s32 %s25, %s347
          %s349 = smul.addr %s348, 32
          %s350 = scalar_lea.hbm %s2, %s349
          %s352 = sshll.u32 %s340, 4
          %s353 = int_to_ptr.vmem [resolvable:$true] %s352
          %355 = dma.vmem_to_hbm [thread:$0]  %s353, 32, %s350, %s337
        $region40: #{tpu_custom_call.1} parent=27 // pred_fallthru
          _
      $region28: #{tpu_custom_call.1} parent=5 // pred_fallthru
        _
      %p356 = scmp.le.s32.totalorder 2, %s15
      // Predicated region
      $region41: #{tpu_custom_call.1} parent=5 // pred_check
        %p357 = pneg %p356
      $region42: #{tpu_custom_call.1} parent=5 // pred_check_branch
        %359 = sbr.rel (%p357) target = $region44
      $region43: #{tpu_custom_call.1} parent=5 // pred_region
        %s360 = ssub.s32 %s15, 2
        // Predicated region
        $region45: #{tpu_custom_call.1} parent=43 // pred_check
          %p361 = pneg %p112
        $region46: #{tpu_custom_call.1} parent=43 // pred_check_branch
          %363 = sbr.rel (%p361) target = $region48
        $region47: #{tpu_custom_call.1} parent=43 // pred_region
          %s364 = sand.u32 %s97, 1
          %s365 = scalar_lea.sflag [#allocation4], %s364
          %s366 = sand.u32 %s97, 1
          %s367 = smul.addr %s366, 2
          %s368 = scalar_lea.vmem [#allocation7], %s367
          %369 = dma.done %s365, 32
        $region48: #{tpu_custom_call.1} parent=43 // pred_fallthru
          _
      $region44: #{tpu_custom_call.1} parent=5 // pred_fallthru
        _
    $region6: #{tpu_custom_call.1} parent=1 // loop_footer
      %s19 = sadd.s32 1, %s15
    $region7: #{tpu_custom_call.1} parent=1 // loop_footer_branch
      %14 = sbr.rel target = $region3
    $region8: #{tpu_custom_call.1} parent=1 // loop_exit
      _
    %370 = vsyncpa [#allocation3], 1
    %s371 = scalar_lea.sflag [#allocation3], 1
    %372 = vsyncpa %s371, 1
    %373 = vsyncpa [#allocation6], 1
    %374 = vsyncpa [#allocation4], 1
    %s375 = scalar_lea.sflag [#allocation4], 1
    %376 = vsyncpa %s375, 1

</llo_original>
